<compile_context>
chip_gen: v5e
topology: v5e:2x2
jax: 0.10.0
libtpu: 0.0.40
codegen_flags: <defaults>
</compile_context>

<pallas_src>
import jax
import jax.numpy as jnp
from jax import lax
from jax.experimental import pallas as pl
from jax.experimental.pallas import tpu as pltpu

F32 = jnp.float32
BF16 = jnp.bfloat16
LN_EPS = 1e-5  # torch.nn.LayerNorm default eps


# ----------------------------------------------------------------------------
# Fused kernel: one grid step == (one node-row tile of A) x (one batch block).
# Data layout inside the kernel: features of the Bt batch elements are stacked
# along lanes, i.e. arrays are (rows, Bt*D) with column b*D+d == (batch b, feat d).
# ----------------------------------------------------------------------------
def _v_layer_kernel(a_ref, x_ref, z2_ref, w1_ref, b1_ref, w2_ref, b2_ref,
                    beta_ref, g_ref, lb_ref, s_ref, o_ref):
    Vt, lane = o_ref.shape          # node-row tile size, Bt*D lanes
    Vfull = x_ref.shape[0]          # full node count (K dim of the rspmm)
    R = z2_ref.shape[0]

    x = x_ref[...]                                       # (V, Bt*D) f32
    # --- generalized_rspmm (densified): one MXU push over all relations of this row tile.
    p = jnp.dot(a_ref[...], x.astype(BF16),
                preferred_element_type=F32)              # (R*Vt, Bt*D)

    # --- per-relation z weighting (fc_z output precomputed in wrapper). Pure VPU;
    #     slices are sublane-aligned because Vt % 8 == 0.
    z2 = z2_ref[...]                                     # (R, Bt*D) f32
    msg = z2[0:1, :] * p[0:Vt, :]
    for r in range(1, R):                                # static unroll, R is small
        msg = msg + z2[r:r + 1, :] * p[r * Vt:(r + 1) * Vt, :]

    # Residual rows of this node tile.
    if Vt == Vfull:
        xr = x
    else:
        row0 = pl.multiple_of(pl.program_id(0) * Vt, 8)
        xr = x_ref[pl.ds(row0, Vt), :]

    # --- fc_out(msg + beta * x): Linear -> ReLU -> Linear with block-diagonal weights
    #     (same lane-stacked layout, lane-dense MXU pushes, bf16 in / f32 acc).
    t = msg + beta_ref[...] * xr
    h = jnp.dot(t.astype(BF16), w1_ref[...], preferred_element_type=F32) + b1_ref[...]
    h = jnp.maximum(h, 0.0)
    h = jnp.dot(h.astype(BF16), w2_ref[...], preferred_element_type=F32) + b2_ref[...]

    # --- LayerNorm over each per-batch D segment of the lane axis.  Segment mean/var
    #     via f32 matmuls with a block-diagonal (1/D) averaging matrix (MXU, no relayout).
    mean = jnp.dot(h, s_ref[...], preferred_element_type=F32)
    c = h - mean
    var = jnp.dot(c * c, s_ref[...], preferred_element_type=F32)
    hn = c * lax.rsqrt(var + LN_EPS) * g_ref[...] + lb_ref[...]

    o_ref[...] = hn + xr


# ----------------------------------------------------------------------------
# Tiling heuristics.
# ----------------------------------------------------------------------------
def _pick_batch_tile(B, D, max_lanes=512):
    """Batch elements stacked along lanes per grid step (Bt*D = lane width)."""
    if B * D <= max_lanes:
        return B                                        # single batch block
    cands = [b for b in range(1, B + 1)
             if B % b == 0 and (b * D) % 128 == 0 and b * D <= max_lanes]
    if cands:
        return max(cands)
    return 1 if D % 128 == 0 else B


def _pick_node_tile(V, R, budget_bytes=8 << 20):
    """Largest node-row tile (multiple of 8, dividing V) whose bf16 A tile fits budget."""
    cands = [d for d in range(8, V + 1, 8) if V % d == 0]
    fit = [d for d in cands if R * d * V * 2 <= budget_bytes]
    return max(fit) if fit else min(cands)


# ----------------------------------------------------------------------------
# Wrapper.
# ----------------------------------------------------------------------------
def knowformer_v_layer(params, x, z, A):
    """x: [B, V, D] f32, z: [B, D] f32, A: [R, V, V] f32 edge multiplicities."""
    B, V, D = x.shape
    R = A.shape[0]
    assert V % 8 == 0, "node count must be a multiple of 8 (sublane alignment)"

    Bt = _pick_batch_tile(B, D)
    Vt = _pick_node_tile(V, R)
    nt, nb = V // Vt, B // Bt
    lane = Bt * D

    # fc_z hoisted out of the kernel (tiny matmul, exact f32), laid out relation-major
    # with batch stacked along lanes: z2_n[r, b*D + d] = fc_z(z)[b, r*D + d].
    z2 = z @ params["wz"] + params["bz"]                              # (B, R*D)
    z2_n = z2.reshape(B, R, D).transpose(1, 0, 2).reshape(R, B * D)

    # x in the lane-stacked layout: x_n[j, b*D + d] = x[b, j, d].
    x_n = x.transpose(1, 0, 2).reshape(V, B * D)

    # A pre-tiled by node rows and cast to bf16 ONCE: a_t[t, r*Vt + v, j] = A[r, t*Vt + v, j].
    a_t = (A.reshape(R, nt, Vt, V).transpose(1, 0, 2, 3)
             .reshape(nt, R * Vt, V).astype(BF16))

    # Block-diagonal MLP weights / LN averaging matrix in the lane-stacked layout.
    eye_bt = jnp.eye(Bt, dtype=F32)
    wbd1 = jnp.kron(eye_bt, params["w1"]).astype(BF16)                # (lane, lane)
    wbd2 = jnp.kron(eye_bt, params["w2"]).astype(BF16)
    s_seg = jnp.kron(eye_bt, jnp.full((D, D), 1.0 / D, F32))          # segment averaging

    tile_l = lambda v: jnp.tile(v, (1, Bt))                           # (1, D) -> (1, lane)
    b1_t, b2_t = tile_l(params["b1"]), tile_l(params["b2"])
    beta_t = tile_l(params["beta"])
    g_t, lb_t = tile_l(params["ln_g"]), tile_l(params["ln_b"])

    const = lambda i, b: (0, 0)
    # VMEM budget: double-buffered blocks + resident weights + headroom.
    blk_bytes = 2 * (R * Vt * V * 2 + V * lane * 4 + R * lane * 4 + Vt * lane * 4)
    res_bytes = 2 * (2 * lane * lane * 2 + lane * lane * 4 + 5 * lane * 4)
    vmem_limit = int(min(64 << 20, max(32 << 20, blk_bytes + res_bytes + (8 << 20))))

    flops = 2 * B * R * V * V * D + 8 * B * V * D * lane
    bytes_accessed = int(a_t.size * 2 + nt * x_n.size * 4 + z2_n.size * 4
                         + B * V * D * 4 + 2 * lane * lane * 2 + lane * lane * 4)
    cost = pl.CostEstimate(flops=flops, transcendentals=B * V * D,
                           bytes_accessed=bytes_accessed)

    out_n = pl.pallas_call(
        _v_layer_kernel,
        grid=(nt, nb),                         # batch innermost -> each A tile DMA'd once
        in_specs=[
            pl.BlockSpec((None, R * Vt, V), lambda i, b: (i, 0, 0)),  # A tile (bf16)
            pl.BlockSpec((V, lane), lambda i, b: (0, b)),             # x (full nodes, batch blk)
            pl.BlockSpec((R, lane), lambda i, b: (0, b)),             # z2 (fc_z output)
            pl.BlockSpec((lane, lane), const),                        # fc_out[0] W (blockdiag)
            pl.BlockSpec((1, lane), const),                           # fc_out[0] b
            pl.BlockSpec((lane, lane), const),                        # fc_out[2] W (blockdiag)
            pl.BlockSpec((1, lane), const),                           # fc_out[2] b
            pl.BlockSpec((1, lane), const),                           # beta
            pl.BlockSpec((1, lane), const),                           # LayerNorm gamma
            pl.BlockSpec((1, lane), const),                           # LayerNorm beta
            pl.BlockSpec((lane, lane), const),                        # LN segment averaging
        ],
        out_specs=pl.BlockSpec((Vt, lane), lambda i, b: (i, b)),
        out_shape=jax.ShapeDtypeStruct((V, B * D), F32),
        compiler_params=pltpu.CompilerParams(
            dimension_semantics=("parallel", "parallel"),
            vmem_limit_bytes=vmem_limit),
        cost_estimate=cost,
    )(a_t, x_n, z2_n, wbd1, b1_t, wbd2, b2_t, beta_t, g_t, lb_t, s_seg)

    # Layout plumbing back to (B, V, D).
    return out_n.reshape(V, B, D).transpose(1, 0, 2)


# ----------------------------------------------------------------------------
# Pure-JAX f32 reference (loose tolerance: kernel uses bf16 matmul inputs).
# ----------------------------------------------------------------------------
def _v_layer_ref(params, x, z, A):
    B, V, D = x.shape
    R = A.shape[0]
    z2 = (z @ params["wz"] + params["bz"]).reshape(B, R, D)
    p = jnp.einsum("rij,bjd->brid", A, x)
    msg = jnp.einsum("brd,brid->bid", z2, p)
    t = msg + params["beta"] * x
    h = jnp.maximum(t @ params["w1"] + params["b1"], 0.0) @ params["w2"] + params["b2"]
    mean = h.mean(-1, keepdims=True)
    var = ((h - mean) ** 2).mean(-1, keepdims=True)
    hn = (h - mean) * lax.rsqrt(var + LN_EPS) * params["ln_g"] + params["ln_b"]
    return hn + x


# ----------------------------------------------------------------------------
# Parameter init (deterministic, synthetic; Linear weights stored as [in, out]).
#   wz[k, r*D + d] == fc_z.weight[r*D + d, k]   (i.e. fc_z.weight.T)
# ----------------------------------------------------------------------------
def init_params(key, num_relation, hidden_dim):
    R, D = num_relation, hidden_dim
    ks = jax.random.split(key, 7)
    s = 0.1
    return {
        "wz": jax.random.normal(ks[0], (D, R * D), F32) * s,   # fc_z.weight.T
        "bz": jax.random.normal(ks[1], (1, R * D), F32) * s,   # fc_z.bias
        "w1": jax.random.normal(ks[2], (D, D), F32) * s,       # fc_out[0].weight.T
        "b1": jax.random.normal(ks[3], (1, D), F32) * s,
        "w2": jax.random.normal(ks[4], (D, D), F32) * s,       # fc_out[2].weight.T
        "b2": jax.random.normal(ks[5], (1, D), F32) * s,
        "beta": jax.random.normal(ks[6], (1, D), F32),         # nn.init.normal_
        "ln_g": jnp.ones((1, D), F32),
        "ln_b": jnp.zeros((1, D), F32),
    }


# ----------------------------------------------------------------------------
if __name__ == "__main__":
    num_relation = 4
    hidden_dim = 32
    B = 2        # batch size
    V = 16       # graph.num_nodes
    E = 48       # number of edges

    key = jax.random.PRNGKey(0)
    kp, kx, kz, kg = jax.random.split(key, 4)

    params = init_params(kp, num_relation, hidden_dim)
    x = jax.random.normal(kx, (B, V, hidden_dim), F32)
    z = jax.random.normal(kz, (B, hidden_dim), F32)

    # Synthetic deterministic graph: edge_index rows are (head, relation, tail).
    ke1, ke2, ke3 = jax.random.split(kg, 3)
    heads = jax.random.randint(ke1, (E,), 0, V)
    rels = jax.random.randint(ke2, (E,), 0, num_relation)
    tails = jax.random.randint(ke3, (E,), 0, V)
    # Dense relational adjacency A[r, i, j] = #edges (i, r, j) (edge weight 1.0).
    A = jnp.zeros((num_relation, V, V), F32).at[rels, heads, tails].add(1.0)
    # bf16 cast of A is exact only while per-(r,i,j) multiplicities are <= 256.
    assert float(jnp.max(A)) <= 256.0

    out = jax.block_until_ready(knowformer_v_layer(params, x, z, A))
    assert out.shape == (B, V, hidden_dim) and out.dtype == F32

    ref = _v_layer_ref(params, x, z, A)
    # Loose tolerance: rspmm / MLP matmul inputs are bf16 (f32 accumulation).
    assert bool(jnp.allclose(out, ref, atol=1e-1, rtol=1e-1)), \
        float(jnp.max(jnp.abs(out - ref)))

    print("KERNEL_OK")
</pallas_src>

<mosaic_0001>
module attributes {stable_mosaic.version = 11 : i64} {
  func.func @_v_layer_kernel(%arg0: i32, %arg1: i32, %arg2: memref<1x64x16xbf16, #tpu.memory_space<vmem>>, %arg3: memref<16x64xf32, #tpu.memory_space<vmem>>, %arg4: memref<4x64xf32, #tpu.memory_space<vmem>>, %arg5: memref<64x64xbf16, #tpu.memory_space<vmem>>, %arg6: memref<1x64xf32, #tpu.memory_space<vmem>>, %arg7: memref<64x64xbf16, #tpu.memory_space<vmem>>, %arg8: memref<1x64xf32, #tpu.memory_space<vmem>>, %arg9: memref<1x64xf32, #tpu.memory_space<vmem>>, %arg10: memref<1x64xf32, #tpu.memory_space<vmem>>, %arg11: memref<1x64xf32, #tpu.memory_space<vmem>>, %arg12: memref<64x64xf32, #tpu.memory_space<vmem>>, %arg13: memref<16x64xf32, #tpu.memory_space<vmem>>) attributes {dimension_semantics = [#tpu.dimension_semantics<parallel>, #tpu.dimension_semantics<parallel>], iteration_bounds = array<i64: 1, 1>, scalar_prefetch = 0 : i64, scratch_operands = 0 : i64, tpu.core_type = #tpu.core_type<tc>, window_params = [{transform_indices = @transform_0, window_bounds = array<i64: 1, 64, 16>}, {transform_indices = @transform_1, window_bounds = array<i64: 16, 64>}, {transform_indices = @transform_2, window_bounds = array<i64: 4, 64>}, {pipeline_mode = #tpu.pipeline_mode<synchronous>, transform_indices = @transform_3, window_bounds = array<i64: 64, 64>}, {pipeline_mode = #tpu.pipeline_mode<synchronous>, transform_indices = @transform_4, window_bounds = array<i64: 1, 64>}, {pipeline_mode = #tpu.pipeline_mode<synchronous>, transform_indices = @transform_5, window_bounds = array<i64: 64, 64>}, {pipeline_mode = #tpu.pipeline_mode<synchronous>, transform_indices = @transform_6, window_bounds = array<i64: 1, 64>}, {pipeline_mode = #tpu.pipeline_mode<synchronous>, transform_indices = @transform_7, window_bounds = array<i64: 1, 64>}, {pipeline_mode = #tpu.pipeline_mode<synchronous>, transform_indices = @transform_8, window_bounds = array<i64: 1, 64>}, {pipeline_mode = #tpu.pipeline_mode<synchronous>, transform_indices = @transform_9, window_bounds = array<i64: 1, 64>}, {pipeline_mode = #tpu.pipeline_mode<synchronous>, transform_indices = @transform_10, window_bounds = array<i64: 64, 64>}, {transform_indices = @transform_11, window_bounds = array<i64: 16, 64>}]} {
    %c0 = arith.constant 0 : index
    %c0_0 = arith.constant 0 : index
    %0 = vector.load %arg3[%c0, %c0_0] : memref<16x64xf32, #tpu.memory_space<vmem>>, vector<16x64xf32>
    %c0_1 = arith.constant 0 : index
    %c0_2 = arith.constant 0 : index
    %c0_3 = arith.constant 0 : index
    %1 = vector.load %arg2[%c0_1, %c0_2, %c0_3] : memref<1x64x16xbf16, #tpu.memory_space<vmem>>, vector<1x64x16xbf16>
    %2 = vector.shape_cast %1 : vector<1x64x16xbf16> to vector<64x16xbf16>
    %3 = arith.truncf %0 : vector<16x64xf32> to vector<16x64xbf16>
    %cst = arith.constant dense<0.000000e+00> : vector<64x64xf32>
    %4 = tpu.matmul %2, %3, %cst {dimension_numbers = #tpu.dot_dimension_numbers<[1], [0], [0], [1], [0, 0, 1, 1], [], []>} : vector<64x16xbf16>, vector<16x64xbf16>, vector<64x64xf32> -> vector<64x64xf32>
    %c0_4 = arith.constant 0 : index
    %c0_5 = arith.constant 0 : index
    %5 = vector.load %arg4[%c0_4, %c0_5] : memref<4x64xf32, #tpu.memory_space<vmem>>, vector<4x64xf32>
    %6 = vector.extract_strided_slice %5 {offsets = [0, 0], sizes = [1, 64], strides = [1, 1]} : vector<4x64xf32> to vector<1x64xf32>
    %7 = vector.extract_strided_slice %4 {offsets = [0, 0], sizes = [16, 64], strides = [1, 1]} : vector<64x64xf32> to vector<16x64xf32>
    %8 = vector.broadcast %6 : vector<1x64xf32> to vector<16x64xf32>
    %9 = arith.mulf %8, %7 : vector<16x64xf32>
    %10 = vector.extract_strided_slice %5 {offsets = [1, 0], sizes = [1, 64], strides = [1, 1]} : vector<4x64xf32> to vector<1x64xf32>
    %11 = vector.extract_strided_slice %4 {offsets = [16, 0], sizes = [16, 64], strides = [1, 1]} : vector<64x64xf32> to vector<16x64xf32>
    %12 = vector.broadcast %10 : vector<1x64xf32> to vector<16x64xf32>
    %13 = arith.mulf %12, %11 : vector<16x64xf32>
    %14 = arith.addf %9, %13 : vector<16x64xf32>
    %15 = vector.extract_strided_slice %5 {offsets = [2, 0], sizes = [1, 64], strides = [1, 1]} : vector<4x64xf32> to vector<1x64xf32>
    %16 = vector.extract_strided_slice %4 {offsets = [32, 0], sizes = [16, 64], strides = [1, 1]} : vector<64x64xf32> to vector<16x64xf32>
    %17 = vector.broadcast %15 : vector<1x64xf32> to vector<16x64xf32>
    %18 = arith.mulf %17, %16 : vector<16x64xf32>
    %19 = arith.addf %14, %18 : vector<16x64xf32>
    %20 = vector.extract_strided_slice %5 {offsets = [3, 0], sizes = [1, 64], strides = [1, 1]} : vector<4x64xf32> to vector<1x64xf32>
    %21 = vector.extract_strided_slice %4 {offsets = [48, 0], sizes = [16, 64], strides = [1, 1]} : vector<64x64xf32> to vector<16x64xf32>
    %22 = vector.broadcast %20 : vector<1x64xf32> to vector<16x64xf32>
    %23 = arith.mulf %22, %21 : vector<16x64xf32>
    %24 = arith.addf %19, %23 : vector<16x64xf32>
    %c0_6 = arith.constant 0 : index
    %c0_7 = arith.constant 0 : index
    %25 = vector.load %arg9[%c0_6, %c0_7] : memref<1x64xf32, #tpu.memory_space<vmem>>, vector<1x64xf32>
    %26 = vector.broadcast %25 : vector<1x64xf32> to vector<16x64xf32>
    %27 = arith.mulf %26, %0 : vector<16x64xf32>
    %28 = arith.addf %24, %27 : vector<16x64xf32>
    %29 = arith.truncf %28 : vector<16x64xf32> to vector<16x64xbf16>
    %c0_8 = arith.constant 0 : index
    %c0_9 = arith.constant 0 : index
    %30 = vector.load %arg5[%c0_8, %c0_9] : memref<64x64xbf16, #tpu.memory_space<vmem>>, vector<64x64xbf16>
    %cst_10 = arith.constant dense<0.000000e+00> : vector<16x64xf32>
    %31 = tpu.matmul %29, %30, %cst_10 {dimension_numbers = #tpu.dot_dimension_numbers<[1], [0], [0], [1], [0, 0, 1, 1], [], []>} : vector<16x64xbf16>, vector<64x64xbf16>, vector<16x64xf32> -> vector<16x64xf32>
    %c0_11 = arith.constant 0 : index
    %c0_12 = arith.constant 0 : index
    %32 = vector.load %arg6[%c0_11, %c0_12] : memref<1x64xf32, #tpu.memory_space<vmem>>, vector<1x64xf32>
    %33 = vector.broadcast %32 : vector<1x64xf32> to vector<16x64xf32>
    %34 = arith.addf %31, %33 : vector<16x64xf32>
    %cst_13 = arith.constant 0.000000e+00 : f32
    %35 = vector.broadcast %cst_13 : f32 to vector<16x64xf32>
    %36 = arith.maximumf %34, %35 : vector<16x64xf32>
    %37 = arith.truncf %36 : vector<16x64xf32> to vector<16x64xbf16>
    %c0_14 = arith.constant 0 : index
    %c0_15 = arith.constant 0 : index
    %38 = vector.load %arg7[%c0_14, %c0_15] : memref<64x64xbf16, #tpu.memory_space<vmem>>, vector<64x64xbf16>
    %cst_16 = arith.constant dense<0.000000e+00> : vector<16x64xf32>
    %39 = tpu.matmul %37, %38, %cst_16 {dimension_numbers = #tpu.dot_dimension_numbers<[1], [0], [0], [1], [0, 0, 1, 1], [], []>} : vector<16x64xbf16>, vector<64x64xbf16>, vector<16x64xf32> -> vector<16x64xf32>
    %c0_17 = arith.constant 0 : index
    %c0_18 = arith.constant 0 : index
    %40 = vector.load %arg8[%c0_17, %c0_18] : memref<1x64xf32, #tpu.memory_space<vmem>>, vector<1x64xf32>
    %41 = vector.broadcast %40 : vector<1x64xf32> to vector<16x64xf32>
    %42 = arith.addf %39, %41 : vector<16x64xf32>
    %c0_19 = arith.constant 0 : index
    %c0_20 = arith.constant 0 : index
    %43 = vector.load %arg12[%c0_19, %c0_20] : memref<64x64xf32, #tpu.memory_space<vmem>>, vector<64x64xf32>
    %cst_21 = arith.constant dense<0.000000e+00> : vector<16x64xf32>
    %44 = tpu.matmul %42, %43, %cst_21 {dimension_numbers = #tpu.dot_dimension_numbers<[1], [0], [0], [1], [0, 0, 1, 1], [], []>} : vector<16x64xf32>, vector<64x64xf32>, vector<16x64xf32> -> vector<16x64xf32>
    %45 = arith.subf %42, %44 : vector<16x64xf32>
    %46 = arith.mulf %45, %45 : vector<16x64xf32>
    %c0_22 = arith.constant 0 : index
    %c0_23 = arith.constant 0 : index
    %47 = vector.load %arg12[%c0_22, %c0_23] : memref<64x64xf32, #tpu.memory_space<vmem>>, vector<64x64xf32>
    %cst_24 = arith.constant dense<0.000000e+00> : vector<16x64xf32>
    %48 = tpu.matmul %46, %47, %cst_24 {dimension_numbers = #tpu.dot_dimension_numbers<[1], [0], [0], [1], [0, 0, 1, 1], [], []>} : vector<16x64xf32>, vector<64x64xf32>, vector<16x64xf32> -> vector<16x64xf32>
    %cst_25 = arith.constant 9.99999974E-6 : f32
    %49 = vector.broadcast %cst_25 : f32 to vector<16x64xf32>
    %50 = arith.addf %48, %49 : vector<16x64xf32>
    %51 = math.rsqrt %50 : vector<16x64xf32>
    %52 = arith.mulf %45, %51 : vector<16x64xf32>
    %c0_26 = arith.constant 0 : index
    %c0_27 = arith.constant 0 : index
    %53 = vector.load %arg10[%c0_26, %c0_27] : memref<1x64xf32, #tpu.memory_space<vmem>>, vector<1x64xf32>
    %54 = vector.broadcast %53 : vector<1x64xf32> to vector<16x64xf32>
    %55 = arith.mulf %52, %54 : vector<16x64xf32>
    %c0_28 = arith.constant 0 : index
    %c0_29 = arith.constant 0 : index
    %56 = vector.load %arg11[%c0_28, %c0_29] : memref<1x64xf32, #tpu.memory_space<vmem>>, vector<1x64xf32>
    %57 = vector.broadcast %56 : vector<1x64xf32> to vector<16x64xf32>
    %58 = arith.addf %55, %57 : vector<16x64xf32>
    %59 = arith.addf %58, %0 : vector<16x64xf32>
    %c0_30 = arith.constant 0 : index
    %c0_31 = arith.constant 0 : index
    %60 = vector.load %arg13[%c0_30, %c0_31] : memref<16x64xf32, #tpu.memory_space<vmem>>, vector<16x64xf32>
    tpu.vector_store %arg13[%c0_30, %c0_31], %59 {strides = array<i32>} : memref<16x64xf32, #tpu.memory_space<vmem>>, vector<16x64xf32>,
    return
  }
  func.func @transform_0(%arg0: i32, %arg1: i32) -> (i32, i32, i32) {
    %c0_i32 = arith.constant 0 : i32
    %c0_i32_0 = arith.constant 0 : i32
    %c0_i32_1 = arith.constant 0 : i32
    return %arg0, %c0_i32, %c0_i32_0 : i32, i32, i32
  }
  func.func @transform_1(%arg0: i32, %arg1: i32) -> (i32, i32) {
    %c0_i32 = arith.constant 0 : i32
    %c0_i32_0 = arith.constant 0 : i32
    return %c0_i32, %arg1 : i32, i32
  }
  func.func @transform_2(%arg0: i32, %arg1: i32) -> (i32, i32) {
    %c0_i32 = arith.constant 0 : i32
    %c0_i32_0 = arith.constant 0 : i32
    return %c0_i32, %arg1 : i32, i32
  }
  func.func @transform_3(%arg0: i32, %arg1: i32) -> (i32, i32) {
    %c0_i32 = arith.constant 0 : i32
    %c0_i32_0 = arith.constant 0 : i32
    %c0_i32_1 = arith.constant 0 : i32
    return %c0_i32, %c0_i32_0 : i32, i32
  }
  func.func @transform_4(%arg0: i32, %arg1: i32) -> (i32, i32) {
    %c0_i32 = arith.constant 0 : i32
    %c0_i32_0 = arith.constant 0 : i32
    %c0_i32_1 = arith.constant 0 : i32
    return %c0_i32, %c0_i32_0 : i32, i32
  }
  func.func @transform_5(%arg0: i32, %arg1: i32) -> (i32, i32) {
    %c0_i32 = arith.constant 0 : i32
    %c0_i32_0 = arith.constant 0 : i32
    %c0_i32_1 = arith.constant 0 : i32
    return %c0_i32, %c0_i32_0 : i32, i32
  }
  func.func @transform_6(%arg0: i32, %arg1: i32) -> (i32, i32) {
    %c0_i32 = arith.constant 0 : i32
    %c0_i32_0 = arith.constant 0 : i32
    %c0_i32_1 = arith.constant 0 : i32
    return %c0_i32, %c0_i32_0 : i32, i32
  }
  func.func @transform_7(%arg0: i32, %arg1: i32) -> (i32, i32) {
    %c0_i32 = arith.constant 0 : i32
    %c0_i32_0 = arith.constant 0 : i32
    %c0_i32_1 = arith.constant 0 : i32
    return %c0_i32, %c0_i32_0 : i32, i32
  }
  func.func @transform_8(%arg0: i32, %arg1: i32) -> (i32, i32) {
    %c0_i32 = arith.constant 0 : i32
    %c0_i32_0 = arith.constant 0 : i32
    %c0_i32_1 = arith.constant 0 : i32
    return %c0_i32, %c0_i32_0 : i32, i32
  }
  func.func @transform_9(%arg0: i32, %arg1: i32) -> (i32, i32) {
    %c0_i32 = arith.constant 0 : i32
    %c0_i32_0 = arith.constant 0 : i32
    %c0_i32_1 = arith.constant 0 : i32
    return %c0_i32, %c0_i32_0 : i32, i32
  }
  func.func @transform_10(%arg0: i32, %arg1: i32) -> (i32, i32) {
    %c0_i32 = arith.constant 0 : i32
    %c0_i32_0 = arith.constant 0 : i32
    %c0_i32_1 = arith.constant 0 : i32
    return %c0_i32, %c0_i32_0 : i32, i32
  }
  func.func @transform_11(%arg0: i32, %arg1: i32) -> (i32, i32) {
    %c0_i32 = arith.constant 0 : i32
    return %arg0, %arg1 : i32, i32
  }
}

</mosaic_0001>

<llo_original>
// kernel: tpu_custom_call.1
$region0: #{tpu_custom_call.1}
  #allocation0 [shape = 'u32[]', space=smem, size = 0x4, offset = 0x4, fixed_abs, tag = 'smem constant byte address 0x4 - core index']
  #allocation1 [shape = 'u32[72,128]{1,0:T(1,128)}', space=vmem, size = 0x9000, scoped, tag = 'internal scratch']
  %s0 = inlined_call_operand.vmem [shape: bf16[1,64,16], index: 0, kind: input, shape index: {}]
  %s1 = inlined_call_operand.hbm [shape: f32[16,64], index: 1, kind: input, shape index: {}]
  %s2 = inlined_call_operand.vmem [shape: f32[4,64], index: 2, kind: input, shape index: {}]
  %s3 = inlined_call_operand.vmem [shape: bf16[64,64], index: 3, kind: input, shape index: {}]
  %s4 = inlined_call_operand.vmem [shape: f32[1,64], index: 4, kind: input, shape index: {}]
  %s5 = inlined_call_operand.hbm [shape: bf16[64,64], index: 5, kind: input, shape index: {}]
  %s6 = inlined_call_operand.vmem [shape: f32[1,64], index: 6, kind: input, shape index: {}]
  %s7 = inlined_call_operand.vmem [shape: f32[1,64], index: 7, kind: input, shape index: {}]
  %s8 = inlined_call_operand.vmem [shape: f32[1,64], index: 8, kind: input, shape index: {}]
  %s9 = inlined_call_operand.vmem [shape: f32[1,64], index: 9, kind: input, shape index: {}]
  %s10 = inlined_call_operand.hbm [shape: f32[64,64], index: 10, kind: input, shape index: {}]
  %s11 = inlined_call_operand.hbm [shape: f32[16,64], index: 11, kind: output, shape index: {}]
  %s12 = sld [smem:[#allocation0]]
  $region66: #{tpu_custom_call.1} parent=0
    _
  %s14 = ssub.s32 1, %s12
  %s15 = scalar_select 0, %s14, %s12
  $region1: #{tpu_custom_call.1} parent=0
    #allocation2 [shape = 'u8[8192]{0}', space=vmem, size = 0x2000, scoped, tag = 'input window, operand 1, single buffered']
    #allocation3 [shape = 's32[1]{0}', space=sflag, size = 0x4, scoped, tag = 'scoped memory for tpu_custom_call.1']
    #allocation4 [shape = 's32[1]{0}', space=sflag, size = 0x4, scoped, tag = 'scoped memory for tpu_custom_call.1']
    #allocation5 [shape = 'u8[16384]{0}', space=vmem, size = 0x4000, scoped, tag = 'input window, operand 5, single buffered']
    #allocation6 [shape = 's32[1]{0}', space=sflag, size = 0x4, scoped, tag = 'scoped memory for tpu_custom_call.1']
    #allocation7 [shape = 'u8[32768]{0}', space=vmem, size = 0x8000, scoped, tag = 'input window, operand 10, single buffered']
    #allocation8 [shape = 'u8[8192]{0}', space=vmem, size = 0x2000, scoped, tag = 'output window, operand 0, single buffered']
    %16 = vsyncpa [#allocation3], 0
    %17 = vsyncpa [#allocation6], 0
    %18 = vsyncpa [#allocation4], 0
    // Predicated region
    $region2: #{tpu_custom_call.1} parent=1 // pred_check
      _
    $region3: #{tpu_custom_call.1} parent=1 // pred_check_branch
      %20 = sbr.rel (0) target = $region5
    $region4: #{tpu_custom_call.1} parent=1 // pred_region
      _
    $region5: #{tpu_custom_call.1} parent=1 // pred_fallthru
      _
    // Predicated region
    $region6: #{tpu_custom_call.1} parent=1 // pred_check
      _
    $region7: #{tpu_custom_call.1} parent=1 // pred_check_branch
      %22 = sbr.rel (0) target = $region9
    $region8: #{tpu_custom_call.1} parent=1 // pred_region
      %24 = vsyncadd [#allocation3], 0
      %s25 = sshll.u32 %s1, 4
      %s26 = int_to_ptr.hbm [resolvable:$true] %s25
      %s27 = sshll.u32 [#allocation2], 4
      %s28 = int_to_ptr.vmem [resolvable:$true] %s27
      %33 = dma.hbm_to_vmem [thread:$0]  %s26, 256, %s28, [#allocation3], 128, 128, 8
    $region9: #{tpu_custom_call.1} parent=1 // pred_fallthru
      _
    // Predicated region
    $region10: #{tpu_custom_call.1} parent=1 // pred_check
      _
    $region11: #{tpu_custom_call.1} parent=1 // pred_check_branch
      %35 = sbr.rel (0) target = $region13
    $region12: #{tpu_custom_call.1} parent=1 // pred_region
      _
    $region13: #{tpu_custom_call.1} parent=1 // pred_fallthru
      _
    // Predicated region
    $region14: #{tpu_custom_call.1} parent=1 // pred_check
      _
    $region15: #{tpu_custom_call.1} parent=1 // pred_check_branch
      %37 = sbr.rel (0) target = $region17
    $region16: #{tpu_custom_call.1} parent=1 // pred_region
      _
    $region17: #{tpu_custom_call.1} parent=1 // pred_fallthru
      _
    // Predicated region
    $region18: #{tpu_custom_call.1} parent=1 // pred_check
      _
    $region19: #{tpu_custom_call.1} parent=1 // pred_check_branch
      %39 = sbr.rel (0) target = $region21
    $region20: #{tpu_custom_call.1} parent=1 // pred_region
      _
    $region21: #{tpu_custom_call.1} parent=1 // pred_fallthru
      _
    // Predicated region
    $region22: #{tpu_custom_call.1} parent=1 // pred_check
      _
    $region23: #{tpu_custom_call.1} parent=1 // pred_check_branch
      %41 = sbr.rel (0) target = $region25
    $region24: #{tpu_custom_call.1} parent=1 // pred_region
      %43 = vsyncadd [#allocation6], 0
      %s44 = sshll.u32 %s5, 4
      %s45 = int_to_ptr.hbm [resolvable:$true] %s44
      %s46 = sshll.u32 [#allocation5], 4
      %s47 = int_to_ptr.vmem [resolvable:$true] %s46
      %52 = dma.hbm_to_vmem [thread:$0]  %s45, 512, %s47, [#allocation6], 64, 64, 4
    $region25: #{tpu_custom_call.1} parent=1 // pred_fallthru
      _
    // Predicated region
    $region26: #{tpu_custom_call.1} parent=1 // pred_check
      _
    $region27: #{tpu_custom_call.1} parent=1 // pred_check_branch
      %54 = sbr.rel (0) target = $region29
    $region28: #{tpu_custom_call.1} parent=1 // pred_region
      _
    $region29: #{tpu_custom_call.1} parent=1 // pred_fallthru
      _
    // Predicated region
    $region30: #{tpu_custom_call.1} parent=1 // pred_check
      _
    $region31: #{tpu_custom_call.1} parent=1 // pred_check_branch
      %56 = sbr.rel (0) target = $region33
    $region32: #{tpu_custom_call.1} parent=1 // pred_region
      _
    $region33: #{tpu_custom_call.1} parent=1 // pred_fallthru
      _
    // Predicated region
    $region34: #{tpu_custom_call.1} parent=1 // pred_check
      _
    $region35: #{tpu_custom_call.1} parent=1 // pred_check_branch
      %58 = sbr.rel (0) target = $region37
    $region36: #{tpu_custom_call.1} parent=1 // pred_region
      _
    $region37: #{tpu_custom_call.1} parent=1 // pred_fallthru
      _
    // Predicated region
    $region38: #{tpu_custom_call.1} parent=1 // pred_check
      _
    $region39: #{tpu_custom_call.1} parent=1 // pred_check_branch
      %60 = sbr.rel (0) target = $region41
    $region40: #{tpu_custom_call.1} parent=1 // pred_region
      _
    $region41: #{tpu_custom_call.1} parent=1 // pred_fallthru
      _
    // Predicated region
    $region42: #{tpu_custom_call.1} parent=1 // pred_check
      _
    $region43: #{tpu_custom_call.1} parent=1 // pred_check_branch
      %62 = sbr.rel (0) target = $region45
    $region44: #{tpu_custom_call.1} parent=1 // pred_region
      %64 = vsyncadd [#allocation6], 0
      %s65 = sshll.u32 %s10, 4
      %s66 = int_to_ptr.hbm [resolvable:$true] %s65
      %s67 = sshll.u32 [#allocation7], 4
      %s68 = int_to_ptr.vmem [resolvable:$true] %s67
      %73 = dma.hbm_to_vmem [thread:$0]  %s66, 1024, %s68, [#allocation6], 128, 128, 8
    $region45: #{tpu_custom_call.1} parent=1 // pred_fallthru
      _
    // Predicated region
    $region46: #{tpu_custom_call.1} parent=1 // pred_check
      _
    $region47: #{tpu_custom_call.1} parent=1 // pred_check_branch
      %75 = sbr.rel (0) target = $region49
    $region48: #{tpu_custom_call.1} parent=1 // pred_region
      %77 = dma.done [#allocation3], 256
    $region49: #{tpu_custom_call.1} parent=1 // pred_fallthru
      _
    // Predicated region
    $region50: #{tpu_custom_call.1} parent=1 // pred_check
      _
    $region51: #{tpu_custom_call.1} parent=1 // pred_check_branch
      %79 = sbr.rel (0) target = $region53
    $region52: #{tpu_custom_call.1} parent=1 // pred_region
      %81 = dma.done [#allocation6], 512
    $region53: #{tpu_custom_call.1} parent=1 // pred_fallthru
      _
    // Predicated region
    $region54: #{tpu_custom_call.1} parent=1 // pred_check
      _
    $region55: #{tpu_custom_call.1} parent=1 // pred_check_branch
      %83 = sbr.rel (0) target = $region57
    $region56: #{tpu_custom_call.1} parent=1 // pred_region
      %85 = dma.done [#allocation6], 1024
    $region57: #{tpu_custom_call.1} parent=1 // pred_fallthru
      _
    %v87 = vld [vmem:[#allocation2] sm:$0xff]
    %v88 = vld [vmem:[#allocation2 + $0x8] sm:$0xff]
    %v89 = vld [vmem:[%s0] sm:$0xf]
    %v90 = vld [vmem:[%s0 + $0x4] sm:$0xf]
    %v91 = vld [vmem:[%s0 + $0x8] sm:$0xf]
    %v92 = vld [vmem:[%s0 + $0xc] sm:$0xf]
    %v93 = vld [vmem:[%s0 + $0x10] sm:$0xf]
    %v94 = vld [vmem:[%s0 + $0x14] sm:$0xf]
    %v95 = vld [vmem:[%s0 + $0x18] sm:$0xf]
    %v96 = vld [vmem:[%s0 + $0x1c] sm:$0xf]
    %v97 = vpack.c.bf16 %v88, %v87
    %v106 = vunpack.c.l.b16 %v89
    %v107 = vunpack.c.l.b16 %v90
    %v108 = vunpack.c.l.b16 %v91
    %v109 = vunpack.c.l.b16 %v92
    %v110 = vunpack.c.l.b16 %v93
    %v111 = vunpack.c.l.b16 %v94
    %v112 = vunpack.c.l.b16 %v95
    %v113 = vunpack.c.l.b16 %v96
    %v114 = vpack.c.b16 %v107, %v106
    %v115 = vpack.c.b16 %v109, %v108
    %v116 = vpack.c.b16 %v111, %v110
    %v117 = vpack.c.b16 %v113, %v112
    %vm118 = vcmask 130048
    %v120 = vsel %vm118, %v114, 0
    %v123 = vsel %vm118, %v115, 0
    %v126 = vsel %vm118, %v116, 0
    %v129 = vsel %vm118, %v117, 0
    %131 = vmatpush.bf16.msra.mxu0 0
    %132 = vmatpush.bf16.msra.mxu0 0
    %133 = vmatpush.bf16.msra.mxu0 0
    %134 = vmatpush.bf16.msra.mxu0 0
    %135 = vmatpush.bf16.msra.mxu0 0
    %136 = vmatpush.bf16.msra.mxu0 0
    %137 = vmatpush.bf16.msra.mxu0 0
    %138 = vmatpush.bf16.msra.mxu0 %v97
    %139 = vmatmul.bf16.gmra.mxu0 %v120
    %v140 = vpop.f32.mrf.mxu0
    %v141 = vadd.f32 0.0, %v140
    %v142 = vpop.f32.mrf.mxu0
    %v143 = vadd.f32 0.0, %v142
    %144 = vmatmul.bf16.gmra.mxu0 %v123
    %v145 = vpop.f32.mrf.mxu0
    %v146 = vadd.f32 0.0, %v145
    %v147 = vpop.f32.mrf.mxu0
    %v148 = vadd.f32 0.0, %v147
    %149 = vmatmul.bf16.gmra.mxu0 %v126
    %v150 = vpop.f32.mrf.mxu0
    %v151 = vadd.f32 0.0, %v150
    %v152 = vpop.f32.mrf.mxu0
    %v153 = vadd.f32 0.0, %v152
    %154 = vmatmul.bf16.gmra.mxu0 %v129
    %v155 = vpop.f32.mrf.mxu0
    %v156 = vadd.f32 0.0, %v155
    %v157 = vpop.f32.mrf.mxu0
    %v158 = vadd.f32 0.0, %v157
    %159 = vdwg.mxu0
    %v160 = vld [vmem:[%s2] sm:$0xf]
    %v161 = vperm.slane %v160, 0
    %v162 = vmul.f32 %v161, %v141
    %v163 = vmul.f32 %v161, %v143
    %v164 = vperm.slane %v160, 1
    %v165 = vmul.f32 %v164, %v146
    %v166 = vmul.f32 %v164, %v148
    %v167 = vadd.f32 %v162, %v165
    %v168 = vadd.f32 %v163, %v166
    %v169 = vperm.slane %v160, 2
    %v170 = vmul.f32 %v169, %v151
    %v171 = vmul.f32 %v169, %v153
    %v172 = vadd.f32 %v167, %v170
    %v173 = vadd.f32 %v168, %v171
    %v174 = vperm.slane %v160, 3
    %v175 = vmul.f32 %v174, %v156
    %v176 = vmul.f32 %v174, %v158
    %v177 = vadd.f32 %v172, %v175
    %v178 = vadd.f32 %v173, %v176
    %v179 = vld [vmem:[%s7] sm:$0x1]
    %v181 = vperm.slane %v179, 0
    %v183 = vmul.f32 %v181, %v87
    %v184 = vmul.f32 %v181, %v88
    %v185 = vadd.f32 %v177, %v183
    %v186 = vadd.f32 %v178, %v184
    %v187 = vpack.c.bf16 %v186, %v185
    %v188 = vld [vmem:[%s3] sm:$0xf]
    %v189 = vld [vmem:[%s3 + $0x4] sm:$0xf]
    %v190 = vld [vmem:[%s3 + $0x8] sm:$0xf]
    %v191 = vld [vmem:[%s3 + $0xc] sm:$0xf]
    %v192 = vld [vmem:[%s3 + $0x10] sm:$0xf]
    %v193 = vld [vmem:[%s3 + $0x14] sm:$0xf]
    %v194 = vld [vmem:[%s3 + $0x18] sm:$0xf]
    %v195 = vld [vmem:[%s3 + $0x1c] sm:$0xf]
    %v196 = vld [vmem:[%s4] sm:$0x1]
    %v198 = vperm.slane %v196, 0
    %v208 = vunpack.c.l.b16 %v188
    %v209 = vunpack.c.l.b16 %v189
    %v210 = vunpack.c.l.b16 %v190
    %v211 = vunpack.c.l.b16 %v191
    %v212 = vunpack.c.l.b16 %v192
    %v213 = vunpack.c.l.b16 %v193
    %v214 = vunpack.c.l.b16 %v194
    %v215 = vunpack.c.l.b16 %v195
    %v216 = vpack.c.b16 %v209, %v208
    %v217 = vpack.c.b16 %v211, %v210
    %v218 = vpack.c.b16 %v213, %v212
    %v219 = vpack.c.b16 %v215, %v214
    %vm224 = vcmask 523264
    %v226 = vsel %vm224, %v187, 0
    %228 = vmatpush.bf16.msra.mxu0 0
    %229 = vmatpush.bf16.msra.mxu0 0
    %230 = vmatpush.bf16.msra.mxu0 0
    %231 = vmatpush.bf16.msra.mxu0 0
    %232 = vmatpush.bf16.msra.mxu0 %v219
    %233 = vmatpush.bf16.msra.mxu0 %v218
    %234 = vmatpush.bf16.msra.mxu0 %v217
    %235 = vmatpush.bf16.msra.mxu0 %v216
    %236 = vmatmul.bf16.gmra.mxu0 %v226
    %v237 = vpop.f32.mrf.mxu0
    %v238 = vadd.f32 %v198, %v237
    %v239 = vpop.f32.mrf.mxu0
    %v240 = vadd.f32 %v198, %v239
    %241 = vdwg.mxu0
    %v242 = vmax.f32 %v238, 0.0
    %v243 = vmax.f32 %v240, 0.0
    %v244 = vpack.c.bf16 %v243, %v242
    %v245 = vld [vmem:[#allocation5] sm:$0xf]
    %v246 = vld [vmem:[#allocation5 + $0x4] sm:$0xf]
    %v247 = vld [vmem:[#allocation5 + $0x8] sm:$0xf]
    %v248 = vld [vmem:[#allocation5 + $0xc] sm:$0xf]
    %v249 = vld [vmem:[#allocation5 + $0x10] sm:$0xf]
    %v250 = vld [vmem:[#allocation5 + $0x14] sm:$0xf]
    %v251 = vld [vmem:[#allocation5 + $0x18] sm:$0xf]
    %v252 = vld [vmem:[#allocation5 + $0x1c] sm:$0xf]
    %v253 = vld [vmem:[%s6] sm:$0x1]
    %v255 = vperm.slane %v253, 0
    %v265 = vunpack.c.l.b16 %v245
    %v266 = vunpack.c.l.b16 %v246
    %v267 = vunpack.c.l.b16 %v247
    %v268 = vunpack.c.l.b16 %v248
    %v269 = vunpack.c.l.b16 %v249
    %v270 = vunpack.c.l.b16 %v250
    %v271 = vunpack.c.l.b16 %v251
    %v272 = vunpack.c.l.b16 %v252
    %v273 = vpack.c.b16 %v266, %v265
    %v274 = vpack.c.b16 %v268, %v267
    %v275 = vpack.c.b16 %v270, %v269
    %v276 = vpack.c.b16 %v272, %v271
    %v282 = vsel %vm224, %v244, 0
    %284 = vmatpush.bf16.msra.mxu0 0
    %285 = vmatpush.bf16.msra.mxu0 0
    %286 = vmatpush.bf16.msra.mxu0 0
    %287 = vmatpush.bf16.msra.mxu0 0
    %288 = vmatpush.bf16.msra.mxu0 %v276
    %289 = vmatpush.bf16.msra.mxu0 %v275
    %290 = vmatpush.bf16.msra.mxu0 %v274
    %291 = vmatpush.bf16.msra.mxu0 %v273
    %292 = vmatmul.bf16.gmra.mxu0 %v282
    %v293 = vpop.f32.mrf.mxu0
    %v294 = vadd.f32 %v255, %v293
    %v295 = vpop.f32.mrf.mxu0
    %v296 = vadd.f32 %v255, %v295
    %297 = vdwg.mxu0
    %v298 = vld [vmem:[#allocation7] sm:$0xff]
    %v299 = vld [vmem:[#allocation7 + $0x8] sm:$0xff]
    %v300 = vld [vmem:[#allocation7 + $0x10] sm:$0xff]
    %v301 = vld [vmem:[#allocation7 + $0x18] sm:$0xff]
    %v302 = vld [vmem:[#allocation7 + $0x20] sm:$0xff]
    %v303 = vld [vmem:[#allocation7 + $0x28] sm:$0xff]
    %v304 = vld [vmem:[#allocation7 + $0x30] sm:$0xff]
    %v305 = vld [vmem:[#allocation7 + $0x38] sm:$0xff]
    %v307 = vsel %vm224, %v294, 0
    %v310 = vsel %vm224, %v296, 0
    %312 = vmatpush.msra.mxu0 0.0
    %313 = vmatpush.msra.mxu0 0.0
    %314 = vmatpush.msra.mxu0 0.0
    %315 = vmatpush.msra.mxu0 0.0
    %316 = vmatpush.msra.mxu0 0.0
    %317 = vmatpush.msra.mxu0 0.0
    %318 = vmatpush.msra.mxu0 0.0
    %319 = vmatpush.msra.mxu0 0.0
    %320 = vmatpush.msra.mxu0 %v305
    %321 = vmatpush.msra.mxu0 %v304
    %322 = vmatpush.msra.mxu0 %v303
    %323 = vmatpush.msra.mxu0 %v302
    %324 = vmatpush.msra.mxu0 %v301
    %325 = vmatpush.msra.mxu0 %v300
    %326 = vmatpush.msra.mxu0 %v299
    %327 = vmatpush.msra.mxu0 %v298
    %328 = vmatmul.f32.gmra.mxu0 %v307
    %v329 = vpop.f32.mrf.mxu0
    %v330 = vadd.f32 0.0, %v329
    %331 = vmatmul.f32.gmra.mxu0 %v310
    %v332 = vpop.f32.mrf.mxu0
    %v333 = vadd.f32 0.0, %v332
    %334 = vdwg.mxu0
    %v335 = vsub.f32 %v294, %v330
    %v336 = vsub.f32 %v296, %v333
    %v337 = vmul.f32 %v335, %v335
    %v338 = vmul.f32 %v336, %v336
    %v340 = vsel %vm224, %v337, 0
    %v343 = vsel %vm224, %v338, 0
    %345 = vmatpush.msra.mxu0 0.0
    %346 = vmatpush.msra.mxu0 0.0
    %347 = vmatpush.msra.mxu0 0.0
    %348 = vmatpush.msra.mxu0 0.0
    %349 = vmatpush.msra.mxu0 0.0
    %350 = vmatpush.msra.mxu0 0.0
    %351 = vmatpush.msra.mxu0 0.0
    %352 = vmatpush.msra.mxu0 0.0
    %353 = vmatpush.msra.mxu0 %v305
    %354 = vmatpush.msra.mxu0 %v304
    %355 = vmatpush.msra.mxu0 %v303
    %356 = vmatpush.msra.mxu0 %v302
    %357 = vmatpush.msra.mxu0 %v301
    %358 = vmatpush.msra.mxu0 %v300
    %359 = vmatpush.msra.mxu0 %v299
    %360 = vmatpush.msra.mxu0 %v298
    %361 = vmatmul.f32.gmra.mxu0 %v340
    %v362 = vpop.f32.mrf.mxu0
    %v363 = vadd.f32 1e-05, %v362
    %364 = vmatmul.f32.gmra.mxu0 %v343
    %v365 = vpop.f32.mrf.mxu0
    %v366 = vadd.f32 1e-05, %v365
    %367 = vdwg.mxu0
    %v368 = vrsqrt.pop %v363
    %v369 = vmul.f32 %v368, %v363
    %v370 = vmul.f32 %v369, %v368
    %v371 = vmul.f32 0.5, %v370
    %v372 = vsub.f32 1.5, %v371
    %v373 = vmul.f32 %v368, %v372
    %vm374 = vweird.f32 %v363
    %vm375 = vweird.f32 %v368
    %vm376 = vmor %vm374, %vm375
    %v377 = vsel %vm376, %v368, %v373
    %v378 = vrsqrt.pop %v366
    %v379 = vmul.f32 %v378, %v366
    %v380 = vmul.f32 %v379, %v378
    %v381 = vmul.f32 0.5, %v380
    %v382 = vsub.f32 1.5, %v381
    %v383 = vmul.f32 %v378, %v382
    %vm384 = vweird.f32 %v366
    %vm385 = vweird.f32 %v378
    %vm386 = vmor %vm384, %vm385
    %v387 = vsel %vm386, %v378, %v383
    %v388 = vmul.f32 %v335, %v377
    %v389 = vmul.f32 %v336, %v387
    %v390 = vld [vmem:[%s8] sm:$0x1]
    %v392 = vperm.slane %v390, 0
    %v394 = vmul.f32 %v388, %v392
    %v395 = vmul.f32 %v389, %v392
    %v396 = vld [vmem:[%s9] sm:$0x1]
    %v398 = vperm.slane %v396, 0
    %v400 = vadd.f32 %v394, %v398
    %v401 = vadd.f32 %v395, %v398
    %v402 = vadd.f32 %v400, %v87
    %v403 = vadd.f32 %v401, %v88
    %404 = vst.msk [vmem:[#allocation8] sm:$0xff] %vm224, %v402
    %405 = vst.msk [vmem:[#allocation8 + $0x8] sm:$0xff] %vm224, %v403
    // Predicated region
    $region58: #{tpu_custom_call.1} parent=1 // pred_check
      _
    $region59: #{tpu_custom_call.1} parent=1 // pred_check_branch
      %407 = sbr.rel (0) target = $region61
    $region60: #{tpu_custom_call.1} parent=1 // pred_region
      %409 = vsyncadd [#allocation4], 0
      %s410 = sshll.u32 [#allocation8], 4
      %s411 = int_to_ptr.vmem [resolvable:$true] %s410
      %s412 = sshll.u32 %s11, 4
      %s413 = int_to_ptr.hbm [resolvable:$true] %s412
      %418 = dma.vmem_to_hbm [thread:$0]  %s411, 256, %s413, [#allocation4], 128, 128, 8
    $region61: #{tpu_custom_call.1} parent=1 // pred_fallthru
      _
    // Predicated region
    $region62: #{tpu_custom_call.1} parent=1 // pred_check
      _
    $region63: #{tpu_custom_call.1} parent=1 // pred_check_branch
      %420 = sbr.rel (0) target = $region65
    $region64: #{tpu_custom_call.1} parent=1 // pred_region
      %422 = dma.done [#allocation4], 256
    $region65: #{tpu_custom_call.1} parent=1 // pred_fallthru
      _
    %423 = vsyncpa [#allocation3], 1
    %424 = vsyncpa [#allocation6], 1
    %425 = vsyncpa [#allocation4], 1

</llo_original>
